<compile_context>
chip_gen: v7x
topology: tpu7x:2x2x1
jax: 0.10.0
libtpu: 0.0.40
codegen_flags: <defaults>
</compile_context>

<pallas_src>
import jax
import jax.numpy as jnp
from jax.experimental import pallas as pl
from jax.experimental.pallas import tpu as pltpu


def _round_up(x, m):
    return ((x + m - 1) // m) * m


def mlp_feature_major_kernel(x_ref, w1t_ref, b1_ref, w2t_ref, b2_ref, o_ref):
    """One batch tile, feature-major: batch rows live on the 128-lane axis.

    x_ref  : (in_dim, TB)     w1t_ref: (hid, in_dim)    b1_ref: (hid, 1)
    w2t_ref: (out_dim, hid)   b2_ref : (out_dim, 1)     o_ref : (out_dim, TB)
    """
    x = x_ref[...]                                        # lane-dense load

    # Layer 1: (hid, in_dim) @ (in_dim, TB) -> (hid, TB).  K=4 is a poor MXU
    # fill, but the MXU is idle otherwise and this keeps ~512 flops/row off
    # the VALU slots; the result is lane-dense.
    h = jnp.dot(w1t_ref[...], x, preferred_element_type=jnp.float32)
    h = jnp.maximum(h + b1_ref[...], 0.0)                 # bias + ReLU (VPU)

    # Layer 2: (out_dim, hid) @ (hid, TB) -> (out_dim, TB); lane-dense store.
    out = jnp.dot(w2t_ref[...], h, preferred_element_type=jnp.float32)
    o_ref[...] = (out + b2_ref[...]).astype(o_ref.dtype)


def adjustment_model_forward(x, w1, b1, w2, b2, *, tile_b=16384,
                             min_pallas_batch=512):
    """Forward pass of AdjustmentModel: relu(x @ w1 + b1) @ w2 + b2.

    x : (..., input_dim)
    w1: (input_dim, hidden_dim)   b1: (hidden_dim,)
    w2: (hidden_dim, output_dim)  b2: (output_dim,)
    """
    in_dim, hid = w1.shape
    out_dim = w2.shape[1]
    lead = x.shape[:-1]
    x2 = x.reshape(-1, in_dim)
    B = x2.shape[0]

    if B <= min_pallas_batch:
        # Tiny batch: pallas_call launch + DMA setup dominate ~100 ns of math;
        # XLA's fused HLO is strictly faster here.
        out = jnp.maximum(x2 @ w1 + b1, 0.0) @ w2 + b2
        return out.reshape(*lead, out_dim)

    # ---------------- Feature-major Pallas path -----------------------------
    x_fm = x2.T                      # (in_dim, B)  -- cheap wrapper transpose
    w1t = w1.T                       # (hid, in_dim)
    w2t = w2.T                       # (out_dim, hid)
    b1c = b1.reshape(hid, 1)
    b2c = b2.reshape(out_dim, 1)

    # Tile only the batch (lane) axis.  Multiple of 128 (lane tiling) and
    # capped so there are always >= 2 grid steps (v7x: 2 TensorCores).
    tb = _round_up(max(int(tile_b), 128), 128)
    tb = min(tb, _round_up(pl.cdiv(B, 2), 128))
    grid = (pl.cdiv(B, tb),)

    out_fm = pl.pallas_call(
        mlp_feature_major_kernel,
        out_shape=jax.ShapeDtypeStruct((out_dim, B), x.dtype),
        grid=grid,
        in_specs=[
            pl.BlockSpec((in_dim, tb), lambda i: (0, i)),    # x tile (streamed)
            pl.BlockSpec((hid, in_dim), lambda i: (0, 0)),   # W1^T  (resident)
            pl.BlockSpec((hid, 1), lambda i: (0, 0)),        # b1    (resident)
            pl.BlockSpec((out_dim, hid), lambda i: (0, 0)),  # W2^T  (resident)
            pl.BlockSpec((out_dim, 1), lambda i: (0, 0)),    # b2    (resident)
        ],
        out_specs=pl.BlockSpec((out_dim, tb), lambda i: (0, i)),
        compiler_params=pltpu.CompilerParams(
            dimension_semantics=("parallel",),      # v7x: shard batch over 2 TCs
            vmem_limit_bytes=32 * 1024 * 1024,      # clears v5e's 16 MiB default
        ),
    )(x_fm, w1t, b1c, w2t, b2c)

    return out_fm.T.reshape(*lead, out_dim)


if __name__ == "__main__":
    input_dim, hidden_dim, output_dim = 4, 64, 2

    key = jax.random.PRNGKey(0)
    kw1, kb1, kw2, kb2, kx0, kx1, kx2 = jax.random.split(key, 7)

    # Deterministic synthetic params (PyTorch-like uniform fan-in scaling).
    bound1 = 1.0 / (input_dim ** 0.5)
    bound2 = 1.0 / (hidden_dim ** 0.5)
    w1 = jax.random.uniform(kw1, (input_dim, hidden_dim), jnp.float32, -bound1, bound1)
    b1 = jax.random.uniform(kb1, (hidden_dim,), jnp.float32, -bound1, bound1)
    w2 = jax.random.uniform(kw2, (hidden_dim, output_dim), jnp.float32, -bound2, bound2)
    b2 = jax.random.uniform(kb2, (output_dim,), jnp.float32, -bound2, bound2)

    def ref_fn(xx):
        return jnp.maximum(xx @ w1 + b1, 0.0) @ w2 + b2

    # ---- tiny batch: fused-jnp fallback path (no Pallas launch) -------------
    x_small = jax.random.normal(kx0, (8, input_dim), jnp.float32)
    out_small = adjustment_model_forward(x_small, w1, b1, w2, b2)
    jax.block_until_ready(out_small)
    assert out_small.shape == (8, output_dim)
    assert jnp.allclose(out_small, ref_fn(x_small), atol=1e-5, rtol=1e-5), "small mismatch"

    # ---- mid batch: feature-major Pallas kernel, 2 parallel grid steps ------
    x_mid = jax.random.normal(kx1, (2048, input_dim), jnp.float32)
    out_mid = adjustment_model_forward(x_mid, w1, b1, w2, b2)
    jax.block_until_ready(out_mid)
    assert out_mid.shape == (2048, output_dim)
    assert jnp.allclose(out_mid, ref_fn(x_mid), atol=1e-5, rtol=1e-5), "mid mismatch"

    # ---- ragged batch (not a multiple of the 128-lane tile): padded tail ----
    x_rag = jax.random.normal(kx2, (1000, input_dim), jnp.float32)
    out_rag = adjustment_model_forward(x_rag, w1, b1, w2, b2)
    jax.block_until_ready(out_rag)
    assert out_rag.shape == (1000, output_dim)
    assert jnp.allclose(out_rag, ref_fn(x_rag), atol=1e-5, rtol=1e-5), "ragged mismatch"

    print("KERNEL_OK")
</pallas_src>

<mosaic_0001>
module attributes {stable_mosaic.version = 11 : i64} {
  func.func @mlp_feature_major_kernel(%arg0: i32, %arg1: memref<4x1024xf32, #tpu.memory_space<vmem>>, %arg2: memref<64x4xf32, #tpu.memory_space<vmem>>, %arg3: memref<64x1xf32, #tpu.memory_space<vmem>>, %arg4: memref<2x64xf32, #tpu.memory_space<vmem>>, %arg5: memref<2x1xf32, #tpu.memory_space<vmem>>, %arg6: memref<2x1024xf32, #tpu.memory_space<vmem>>) attributes {dimension_semantics = [#tpu.dimension_semantics<parallel>], iteration_bounds = array<i64: 2>, scalar_prefetch = 0 : i64, scratch_operands = 0 : i64, tpu.core_type = #tpu.core_type<tc>, window_params = [{transform_indices = @transform_0, window_bounds = array<i64: 4, 1024>}, {pipeline_mode = #tpu.pipeline_mode<synchronous>, transform_indices = @transform_1, window_bounds = array<i64: 64, 4>}, {pipeline_mode = #tpu.pipeline_mode<synchronous>, transform_indices = @transform_2, window_bounds = array<i64: 64, 1>}, {pipeline_mode = #tpu.pipeline_mode<synchronous>, transform_indices = @transform_3, window_bounds = array<i64: 2, 64>}, {pipeline_mode = #tpu.pipeline_mode<synchronous>, transform_indices = @transform_4, window_bounds = array<i64: 2, 1>}, {transform_indices = @transform_5, window_bounds = array<i64: 2, 1024>}]} {
    %c0 = arith.constant 0 : index
    %c0_0 = arith.constant 0 : index
    %0 = vector.load %arg1[%c0, %c0_0] : memref<4x1024xf32, #tpu.memory_space<vmem>>, vector<4x1024xf32>
    %c0_1 = arith.constant 0 : index
    %c0_2 = arith.constant 0 : index
    %1 = vector.load %arg2[%c0_1, %c0_2] : memref<64x4xf32, #tpu.memory_space<vmem>>, vector<64x4xf32>
    %cst = arith.constant dense<0.000000e+00> : vector<64x1024xf32>
    %2 = tpu.matmul %1, %0, %cst {dimension_numbers = #tpu.dot_dimension_numbers<[1], [0], [0], [1], [0, 0, 1, 1], [], []>} : vector<64x4xf32>, vector<4x1024xf32>, vector<64x1024xf32> -> vector<64x1024xf32>
    %c0_3 = arith.constant 0 : index
    %c0_4 = arith.constant 0 : index
    %3 = vector.load %arg3[%c0_3, %c0_4] : memref<64x1xf32, #tpu.memory_space<vmem>>, vector<64x1xf32>
    %4 = vector.broadcast %3 : vector<64x1xf32> to vector<64x1024xf32>
    %5 = arith.addf %2, %4 : vector<64x1024xf32>
    %cst_5 = arith.constant 0.000000e+00 : f32
    %6 = vector.broadcast %cst_5 : f32 to vector<64x1024xf32>
    %7 = arith.maximumf %5, %6 : vector<64x1024xf32>
    %c0_6 = arith.constant 0 : index
    %c0_7 = arith.constant 0 : index
    %8 = vector.load %arg4[%c0_6, %c0_7] : memref<2x64xf32, #tpu.memory_space<vmem>>, vector<2x64xf32>
    %cst_8 = arith.constant dense<0.000000e+00> : vector<2x1024xf32>
    %9 = tpu.matmul %8, %7, %cst_8 {dimension_numbers = #tpu.dot_dimension_numbers<[1], [0], [0], [1], [0, 0, 1, 1], [], []>} : vector<2x64xf32>, vector<64x1024xf32>, vector<2x1024xf32> -> vector<2x1024xf32>
    %c0_9 = arith.constant 0 : index
    %c0_10 = arith.constant 0 : index
    %10 = vector.load %arg5[%c0_9, %c0_10] : memref<2x1xf32, #tpu.memory_space<vmem>>, vector<2x1xf32>
    %11 = vector.broadcast %10 : vector<2x1xf32> to vector<2x1024xf32>
    %12 = arith.addf %9, %11 : vector<2x1024xf32>
    %c0_11 = arith.constant 0 : index
    %c0_12 = arith.constant 0 : index
    %13 = vector.load %arg6[%c0_11, %c0_12] : memref<2x1024xf32, #tpu.memory_space<vmem>>, vector<2x1024xf32>
    tpu.vector_store %arg6[%c0_11, %c0_12], %12 {strides = array<i32>} : memref<2x1024xf32, #tpu.memory_space<vmem>>, vector<2x1024xf32>,
    return
  }
  func.func @transform_0(%arg0: i32) -> (i32, i32) {
    %c0_i32 = arith.constant 0 : i32
    %c0_i32_0 = arith.constant 0 : i32
    return %c0_i32, %arg0 : i32, i32
  }
  func.func @transform_1(%arg0: i32) -> (i32, i32) {
    %c0_i32 = arith.constant 0 : i32
    %c0_i32_0 = arith.constant 0 : i32
    %c0_i32_1 = arith.constant 0 : i32
    return %c0_i32, %c0_i32_0 : i32, i32
  }
  func.func @transform_2(%arg0: i32) -> (i32, i32) {
    %c0_i32 = arith.constant 0 : i32
    %c0_i32_0 = arith.constant 0 : i32
    %c0_i32_1 = arith.constant 0 : i32
    return %c0_i32, %c0_i32_0 : i32, i32
  }
  func.func @transform_3(%arg0: i32) -> (i32, i32) {
    %c0_i32 = arith.constant 0 : i32
    %c0_i32_0 = arith.constant 0 : i32
    %c0_i32_1 = arith.constant 0 : i32
    return %c0_i32, %c0_i32_0 : i32, i32
  }
  func.func @transform_4(%arg0: i32) -> (i32, i32) {
    %c0_i32 = arith.constant 0 : i32
    %c0_i32_0 = arith.constant 0 : i32
    %c0_i32_1 = arith.constant 0 : i32
    return %c0_i32, %c0_i32_0 : i32, i32
  }
  func.func @transform_5(%arg0: i32) -> (i32, i32) {
    %c0_i32 = arith.constant 0 : i32
    %c0_i32_0 = arith.constant 0 : i32
    return %c0_i32, %arg0 : i32, i32
  }
}

</mosaic_0001>

<llo_original>
// kernel: tpu_custom_call.1
$region0: #{tpu_custom_call.1}
  #allocation0 [shape = 'u32[]', space=smem, size = 0x4, offset = 0x4, fixed_abs, tag = 'smem constant byte address 0x4 - core index']
  #allocation1 [shape = 'u32[144,128]{1,0:T(1,128)}', space=vmem, size = 0x12000, scoped, tag = 'internal scratch']
  %s0 = inlined_call_operand.vmem [shape: f32[4,2048], index: 0, kind: input, shape index: {}]
  %s1 = inlined_call_operand.vmem [shape: f32[64,4], index: 1, kind: input, shape index: {}]
  %s2 = inlined_call_operand.vmem [shape: f32[64,1], index: 2, kind: input, shape index: {}]
  %s3 = inlined_call_operand.vmem [shape: f32[2,64], index: 3, kind: input, shape index: {}]
  %s4 = inlined_call_operand.vmem [shape: f32[2,1], index: 4, kind: input, shape index: {}]
  %s5 = inlined_call_operand.hbm [shape: f32[2,2048], index: 5, kind: output, shape index: {}]
  %s6 = sld [smem:[#allocation0]]
  $region53: #{tpu_custom_call.1} parent=0
    _
  %s8 = ssub.s32 1, %s6
  %s9 = scalar_select 0, %s8, %s6
  $region1: #{tpu_custom_call.1} parent=0
    #allocation2 [shape = 'u8[16384]{0}', space=vmem, size = 0x4000, scoped, tag = 'output window, operand 0']
    #allocation3 [shape = 's32[2]{0}', space=sflag, size = 0x8, scoped, tag = 'scoped memory for tpu_custom_call.1']
    %10 = vsyncpa [#allocation3], 0
    %s11 = scalar_lea.sflag [#allocation3], 1
    %12 = vsyncpa %s11, 0
    loop: start=0, step=1, limit=4
    $region2: #{tpu_custom_call.1} parent=1 // loop_pre_header
      _
    $region3: #{tpu_custom_call.1} parent=1 // loop_header
      %s14 = sphi 0, %s18
      %p15 = scmp.ge.s32.totalorder %s14, 4
      %s24 = sphi 0, %s26
      %s27 = sphi 0, %s24
      %s28 = sphi 0, %s27
      %s44 = sphi 0, %s28
      %s48 = sphi 0, %s48
      %s50 = sphi 0, %s48
      %s51 = sphi 0, %s50
      %s65 = sphi 0, %s51
      %s69 = sphi 0, %s69
      %s71 = sphi 0, %s69
      %s72 = sphi 0, %s71
      %s86 = sphi 0, %s72
      %s90 = sphi 0, %s90
      %s92 = sphi 0, %s90
      %s93 = sphi 0, %s92
      %s107 = sphi 0, %s93
      %s111 = sphi 0, %s111
      %s113 = sphi 0, %s111
      %s114 = sphi 0, %s113
      %s128 = sphi 0, %s114
      %s134 = sphi 0, %s136
      %s137 = sphi 0, %s134
      %s138 = sphi 0, %s137
      %s154 = sphi 0, %s138
    $region4: #{tpu_custom_call.1} parent=1 // loop_header_branch
      %17 = sbr.rel (%p15) target = $region8
    $region5: #{tpu_custom_call.1} parent=1 // loop_body
      %s19 = ssub.s32 %s14, 1
      %s20 = ssub.s32 %s14, 2
      %s21 = sadd.s32 %s14, 1
      %s22 = ssub.s32 %s14, %s21
      %p23 = scmp.eq.s32.totalorder %s22, 0
      %s25 = sadd.s32 %s24, 1
      %s26 = scalar_select %p23, %s24, %s25
      %p29 = pneg %p23
      %p30 = scmp.eq.s32.totalorder %s14, 1
      %p31 = por %p29, %p30
      %p32 = scmp.ne.s32.totalorder %s24, %s27
      %p33 = scmp.eq.s32.totalorder %s14, 0
      %p34 = por %p32, %p33
      %p35 = scmp.ne.s32.totalorder %s24, %s27
      %p36 = scmp.eq.s32.totalorder %s19, 1
      %p37 = por %p35, %p36
      %p38 = scmp.ne.s32.totalorder %s27, %s28
      %p39 = scmp.eq.s32.totalorder %s19, 0
      %p40 = por %p38, %p39
      %p41 = scmp.ne.s32.totalorder %s27, %s28
      %p42 = scmp.eq.s32.totalorder %s20, 1
      %p43 = por %p41, %p42
      %p45 = scmp.ne.s32.totalorder %s28, %s44
      %p46 = scmp.eq.s32.totalorder %s20, 0
      %p47 = por %p45, %p46
      %s49 = sadd.s32 %s48, 1
      %p52 = scmp.eq.s32.totalorder %s14, 1
      %p53 = scmp.ne.s32.totalorder %s48, %s50
      %p54 = scmp.eq.s32.totalorder %s14, 0
      %p55 = por %p53, %p54
      %p56 = scmp.ne.s32.totalorder %s48, %s50
      %p57 = scmp.eq.s32.totalorder %s19, 1
      %p58 = por %p56, %p57
      %p59 = scmp.ne.s32.totalorder %s50, %s51
      %p60 = scmp.eq.s32.totalorder %s19, 0
      %p61 = por %p59, %p60
      %p62 = scmp.ne.s32.totalorder %s50, %s51
      %p63 = scmp.eq.s32.totalorder %s20, 1
      %p64 = por %p62, %p63
      %p66 = scmp.ne.s32.totalorder %s51, %s65
      %p67 = scmp.eq.s32.totalorder %s20, 0
      %p68 = por %p66, %p67
      %s70 = sadd.s32 %s69, 1
      %p73 = scmp.eq.s32.totalorder %s14, 1
      %p74 = scmp.ne.s32.totalorder %s69, %s71
      %p75 = scmp.eq.s32.totalorder %s14, 0
      %p76 = por %p74, %p75
      %p77 = scmp.ne.s32.totalorder %s69, %s71
      %p78 = scmp.eq.s32.totalorder %s19, 1
      %p79 = por %p77, %p78
      %p80 = scmp.ne.s32.totalorder %s71, %s72
      %p81 = scmp.eq.s32.totalorder %s19, 0
      %p82 = por %p80, %p81
      %p83 = scmp.ne.s32.totalorder %s71, %s72
      %p84 = scmp.eq.s32.totalorder %s20, 1
      %p85 = por %p83, %p84
      %p87 = scmp.ne.s32.totalorder %s72, %s86
      %p88 = scmp.eq.s32.totalorder %s20, 0
      %p89 = por %p87, %p88
      %s91 = sadd.s32 %s90, 1
      %p94 = scmp.eq.s32.totalorder %s14, 1
      %p95 = scmp.ne.s32.totalorder %s90, %s92
      %p96 = scmp.eq.s32.totalorder %s14, 0
      %p97 = por %p95, %p96
      %p98 = scmp.ne.s32.totalorder %s90, %s92
      %p99 = scmp.eq.s32.totalorder %s19, 1
      %p100 = por %p98, %p99
      %p101 = scmp.ne.s32.totalorder %s92, %s93
      %p102 = scmp.eq.s32.totalorder %s19, 0
      %p103 = por %p101, %p102
      %p104 = scmp.ne.s32.totalorder %s92, %s93
      %p105 = scmp.eq.s32.totalorder %s20, 1
      %p106 = por %p104, %p105
      %p108 = scmp.ne.s32.totalorder %s93, %s107
      %p109 = scmp.eq.s32.totalorder %s20, 0
      %p110 = por %p108, %p109
      %s112 = sadd.s32 %s111, 1
      %p115 = scmp.eq.s32.totalorder %s14, 1
      %p116 = scmp.ne.s32.totalorder %s111, %s113
      %p117 = scmp.eq.s32.totalorder %s14, 0
      %p118 = por %p116, %p117
      %p119 = scmp.ne.s32.totalorder %s111, %s113
      %p120 = scmp.eq.s32.totalorder %s19, 1
      %p121 = por %p119, %p120
      %p122 = scmp.ne.s32.totalorder %s113, %s114
      %p123 = scmp.eq.s32.totalorder %s19, 0
      %p124 = por %p122, %p123
      %p125 = scmp.ne.s32.totalorder %s113, %s114
      %p126 = scmp.eq.s32.totalorder %s20, 1
      %p127 = por %p125, %p126
      %p129 = scmp.ne.s32.totalorder %s114, %s128
      %p130 = scmp.eq.s32.totalorder %s20, 0
      %p131 = por %p129, %p130
      %s132 = ssub.s32 %s14, %s21
      %p133 = scmp.eq.s32.totalorder %s132, 0
      %s135 = sadd.s32 %s134, 1
      %s136 = scalar_select %p133, %s134, %s135
      %p139 = pneg %p133
      %p140 = scmp.eq.s32.totalorder %s14, 1
      %p141 = por %p139, %p140
      %p142 = scmp.ne.s32.totalorder %s134, %s137
      %p143 = scmp.eq.s32.totalorder %s14, 0
      %p144 = por %p142, %p143
      %p145 = scmp.ne.s32.totalorder %s134, %s137
      %p146 = scmp.eq.s32.totalorder %s19, 1
      %p147 = por %p145, %p146
      %p148 = scmp.ne.s32.totalorder %s137, %s138
      %p149 = scmp.eq.s32.totalorder %s19, 0
      %p150 = por %p148, %p149
      %p151 = scmp.ne.s32.totalorder %s137, %s138
      %p152 = scmp.eq.s32.totalorder %s20, 1
      %p153 = por %p151, %p152
      %p155 = scmp.ne.s32.totalorder %s138, %s154
      %p156 = scmp.eq.s32.totalorder %s20, 0
      %p157 = por %p155, %p156
      %p158 = scmp.le.s32.totalorder 1, %s14
      %p159 = scmp.lt.s32.totalorder %s14, 3
      %p160 = pnand %p158, %p159
      %p161 = pneg %p160
      // Predicated region
      $region9: #{tpu_custom_call.1} parent=5 // pred_check
        _
      $region10: #{tpu_custom_call.1} parent=5 // pred_check_branch
        %163 = sbr.rel (%p160) target = $region12
      $region11: #{tpu_custom_call.1} parent=5 // pred_region
        %s164 = ssub.s32 %s14, 1
        // Predicated region
        $region13: #{tpu_custom_call.1} parent=11 // pred_check
          %p165 = pneg %p61
        $region14: #{tpu_custom_call.1} parent=11 // pred_check_branch
          %167 = sbr.rel (%p165) target = $region16
        $region15: #{tpu_custom_call.1} parent=11 // pred_region
          _
        $region16: #{tpu_custom_call.1} parent=11 // pred_fallthru
          _
        // Predicated region
        $region17: #{tpu_custom_call.1} parent=11 // pred_check
          %p168 = pneg %p82
        $region18: #{tpu_custom_call.1} parent=11 // pred_check_branch
          %170 = sbr.rel (%p168) target = $region20
        $region19: #{tpu_custom_call.1} parent=11 // pred_region
          _
        $region20: #{tpu_custom_call.1} parent=11 // pred_fallthru
          _
        // Predicated region
        $region21: #{tpu_custom_call.1} parent=11 // pred_check
          %p171 = pneg %p103
        $region22: #{tpu_custom_call.1} parent=11 // pred_check_branch
          %173 = sbr.rel (%p171) target = $region24
        $region23: #{tpu_custom_call.1} parent=11 // pred_region
          _
        $region24: #{tpu_custom_call.1} parent=11 // pred_fallthru
          _
        // Predicated region
        $region25: #{tpu_custom_call.1} parent=11 // pred_check
          %p174 = pneg %p124
        $region26: #{tpu_custom_call.1} parent=11 // pred_check_branch
          %176 = sbr.rel (%p174) target = $region28
        $region27: #{tpu_custom_call.1} parent=11 // pred_region
          _
        $region28: #{tpu_custom_call.1} parent=11 // pred_fallthru
          _
      $region12: #{tpu_custom_call.1} parent=5 // pred_fallthru
        _
      %p177 = scmp.lt.s32.totalorder %s14, 2
      // Predicated region
      $region29: #{tpu_custom_call.1} parent=5 // pred_check
        %p178 = pneg %p177
      $region30: #{tpu_custom_call.1} parent=5 // pred_check_branch
        %180 = sbr.rel (%p178) target = $region32
      $region31: #{tpu_custom_call.1} parent=5 // pred_region
        // Predicated region
        $region33: #{tpu_custom_call.1} parent=31 // pred_check
          %p181 = pneg %p34
        $region34: #{tpu_custom_call.1} parent=31 // pred_check_branch
          %183 = sbr.rel (%p181) target = $region36
        $region35: #{tpu_custom_call.1} parent=31 // pred_region
          %s184 = smul.u32 8, %s14
          %p185 = scmp.lt.s32.totalorder %s184, 15
          %s186 = scalar_select %p185, %s184, 15
          %s187 = smul.addr %s186, 4
          %s188 = scalar_lea.vmem %s0, %s187
          %s189 = smul.u32 8, %s14
        $region36: #{tpu_custom_call.1} parent=31 // pred_fallthru
          _
      $region32: #{tpu_custom_call.1} parent=5 // pred_fallthru
        _
      %p190 = scmp.le.s32.totalorder 1, %s14
      %p191 = scmp.lt.s32.totalorder %s14, 3
      %p192 = pnand %p190, %p191
      %p193 = pneg %p192
      // Predicated region
      $region37: #{tpu_custom_call.1} parent=5 // pred_check
        _
      $region38: #{tpu_custom_call.1} parent=5 // pred_check_branch
        %195 = sbr.rel (%p192) target = $region40
      $region39: #{tpu_custom_call.1} parent=5 // pred_region
        %s196 = ssub.s32 %s14, 1
        %s197 = smul.u32 8, %s19
        %p198 = scmp.lt.s32.totalorder %s197, 15
        %s199 = scalar_select %p198, %s197, 15
        %s200 = smul.addr %s199, 4
        %s201 = scalar_lea.vmem %s0, %s200
        %p202 = pneg %p40
        %p203 = pneg %p37
        %p204 = pneg %p61
        %p205 = pneg %p58
        %p206 = pneg %p82
        %p207 = pneg %p79
        %p208 = pneg %p103
        %p209 = pneg %p100
        %p210 = pneg %p124
        %p211 = pneg %p121
        %p212 = pneg %p150
        %p213 = pneg %p147
        %s214 = sand.u32 %s137, 1
        %s215 = scalar_lea.sflag [#allocation3], %s214
        %s216 = sand.u32 %s137, 1
        %s217 = smul.addr %s216, 16
        %s218 = scalar_lea.vmem [#allocation2], %s217
        %s219 = smul.u32 8, %s19
        %p220 = scmp.lt.s32.totalorder %s219, 15
        %s221 = scalar_select %p220, %s219, 15
        %s222 = smul.addr %s221, 4
        %s223 = scalar_lea.vmem %s0, %s222
        %s224 = smul.u32 8, %s19
        %s225 = smul.u32 8, %s19
        %v226 = vld [vmem:[%s223] sm:$0xff]
        %v227 = vld [vmem:[%s223 + $0x8] sm:$0xff]
        %v228 = vld [vmem:[%s223 + $0x10] sm:$0xff]
        %v229 = vld [vmem:[%s223 + $0x18] sm:$0xff]
        %v230 = vld [vmem:[%s1] sm:$0xff]
        %v231 = vld [vmem:[%s1 + $0x8] sm:$0xff]
        %v232 = vld [vmem:[%s1 + $0x10] sm:$0xff]
        %v233 = vld [vmem:[%s1 + $0x18] sm:$0xff]
        %v234 = vld [vmem:[%s1 + $0x20] sm:$0xff]
        %v235 = vld [vmem:[%s1 + $0x28] sm:$0xff]
        %v236 = vld [vmem:[%s1 + $0x30] sm:$0xff]
        %v237 = vld [vmem:[%s1 + $0x38] sm:$0xff]
        %v238 = vld [vmem:[%s2] sm:$0xff]
        %v239 = vld [vmem:[%s2 + $0x8] sm:$0xff]
        %v240 = vld [vmem:[%s2 + $0x10] sm:$0xff]
        %v241 = vld [vmem:[%s2 + $0x18] sm:$0xff]
        %v242 = vld [vmem:[%s2 + $0x20] sm:$0xff]
        %v243 = vld [vmem:[%s2 + $0x28] sm:$0xff]
        %v244 = vld [vmem:[%s2 + $0x30] sm:$0xff]
        %v245 = vld [vmem:[%s2 + $0x38] sm:$0xff]
        %247 = vset.pattern.permute.xlu0 0
        %248 = vperm.xlu0 %247, %v238
        %v249 = vpop.permute.xlu0 %248
        %252 = vset.pattern.permute.xlu0 0
        %253 = vperm.xlu0 %252, %v239
        %v254 = vpop.permute.xlu0 %253
        %257 = vset.pattern.permute.xlu0 0
        %258 = vperm.xlu0 %257, %v240
        %v259 = vpop.permute.xlu0 %258
        %262 = vset.pattern.permute.xlu0 0
        %263 = vperm.xlu0 %262, %v241
        %v264 = vpop.permute.xlu0 %263
        %267 = vset.pattern.permute.xlu0 0
        %268 = vperm.xlu0 %267, %v242
        %v269 = vpop.permute.xlu0 %268
        %272 = vset.pattern.permute.xlu0 0
        %273 = vperm.xlu0 %272, %v243
        %v274 = vpop.permute.xlu0 %273
        %277 = vset.pattern.permute.xlu0 0
        %278 = vperm.xlu0 %277, %v244
        %v279 = vpop.permute.xlu0 %278
        %282 = vset.pattern.permute.xlu0 0
        %283 = vperm.xlu0 %282, %v245
        %v284 = vpop.permute.xlu0 %283
        %v290 = vcombine.high %v226, %v226
        %v291 = vcombine.high %v227, %v227
        %v292 = vcombine.high %v228, %v228
        %v293 = vcombine.high %v229, %v229
        %vm294 = vcmask 31744
        %v296 = vsel %vm294, %v230, 0
        %v299 = vsel %vm294, %v231, 0
        %v302 = vsel %vm294, %v232, 0
        %v305 = vsel %vm294, %v233, 0
        %v308 = vsel %vm294, %v234, 0
        %v311 = vsel %vm294, %v235, 0
        %v314 = vsel %vm294, %v236, 0
        %v317 = vsel %vm294, %v237, 0
        %vm319 = vcmask 1043456
        %v320 = vsel %vm319, %v226, 0
        %v322 = vsel %vm319, %v290, 0
        %v324 = vsel %vm319, %v227, 0
        %v326 = vsel %vm319, %v291, 0
        %v328 = vsel %vm319, %v228, 0
        %v330 = vsel %vm319, %v292, 0
        %v332 = vsel %vm319, %v229, 0
        %v334 = vsel %vm319, %v293, 0
        %336 = vmatprep.subr.mxu0 %v322
        %337 = vmatpush1.msra.mxu0 %v320
        %338 = vmatprep.subr.mxu0 0.0
        %339 = vmatpush1.msra.mxu0 0.0
        %340 = vmatprep.subr.mxu0 0.0
        %341 = vmatpush1.msra.mxu0 0.0
        %342 = vmatprep.subr.mxu0 0.0
        %343 = vmatpush1.msra.mxu0 0.0
        %344 = vmatprep.subr.mxu0 0.0
        %345 = vmatpush1.msra.mxu0 0.0
        %346 = vmatprep.subr.mxu0 0.0
        %347 = vmatpush1.msra.mxu0 0.0
        %348 = vmatprep.subr.mxu0 0.0
        %349 = vmatpush1.msra.mxu0 0.0
        %350 = vmatprep.subr.mxu0 0.0
        %351 = vmatpush1.msra.mxu0 0.0
        %352 = vmatprep.subr.mxu0 0.0
        %353 = vmatpush1.msra.mxu0 0.0
        %354 = vmatprep.subr.mxu0 0.0
        %355 = vmatpush1.msra.mxu0 0.0
        %356 = vmatprep.subr.mxu0 0.0
        %357 = vmatpush1.msra.mxu0 0.0
        %358 = vmatprep.subr.mxu0 0.0
        %359 = vmatpush1.msra.mxu0 0.0
        %360 = vmatprep.subr.mxu0 0.0
        %361 = vmatpush1.msra.mxu0 0.0
        %362 = vmatprep.subr.mxu0 0.0
        %363 = vmatpush1.msra.mxu0 0.0
        %364 = vmatprep.subr.mxu0 0.0
        %365 = vmatpush1.msra.mxu0 0.0
        %366 = vmatprep.subr.mxu0 0.0
        %367 = vmatpush1.msra.mxu0 0.0
        %368 = vmatprep.subr.mxu0 0.0
        %369 = vmatpush1.msra.mxu0 0.0
        %370 = vmatprep.subr.mxu0 0.0
        %371 = vmatpush1.msra.mxu0 0.0
        %372 = vmatprep.subr.mxu0 0.0
        %373 = vmatpush1.msra.mxu0 0.0
        %374 = vmatprep.subr.mxu0 0.0
        %375 = vmatpush1.msra.mxu0 0.0
        %376 = vmatprep.subr.mxu0 0.0
        %377 = vmatpush1.msra.mxu0 0.0
        %378 = vmatprep.subr.mxu0 0.0
        %379 = vmatpush1.msra.mxu0 0.0
        %380 = vmatprep.subr.mxu0 0.0
        %381 = vmatpush1.msra.mxu0 0.0
        %382 = vmatprep.subr.mxu0 0.0
        %383 = vmatpush1.msra.mxu0 0.0
        %384 = vmatprep.subr.mxu0 0.0
        %385 = vmatpush1.msra.mxu0 0.0
        %386 = vmatprep.subr.mxu0 0.0
        %387 = vmatpush1.msra.mxu0 0.0
        %388 = vmatprep.subr.mxu0 0.0
        %389 = vmatpush1.msra.mxu0 0.0
        %390 = vmatprep.subr.mxu0 0.0
        %391 = vmatpush1.msra.mxu0 0.0
        %392 = vmatprep.subr.mxu0 0.0
        %393 = vmatpush1.msra.mxu0 0.0
        %394 = vmatprep.subr.mxu0 0.0
        %395 = vmatpush1.msra.mxu0 0.0
        %396 = vmatprep.subr.mxu0 0.0
        %397 = vmatpush1.msra.mxu0 0.0
        %398 = vmatprep.subr.mxu0 0.0
        %399 = vmatpush1.msra.mxu0 0.0
        %400 = vmatprep.mubr.f32.mxu0 0.0
        %401 = vmatmul.mubr.f32.gmra.mrb[0].mxu0 %v296
        %v402 = vpop.f32.mrb[0].mxu0
        %v403 = vadd.f32 %v249, %v402
        %v404 = vpop.f32.mrb[0].mxu0
        %v405 = vadd.f32 %v249, %v404
        %406 = vmatprep.mubr.f32.mxu0 0.0
        %407 = vmatmul.mubr.f32.gmra.mrb[0].mxu0 %v299
        %v408 = vpop.f32.mrb[0].mxu0
        %v409 = vadd.f32 %v254, %v408
        %v410 = vpop.f32.mrb[0].mxu0
        %v411 = vadd.f32 %v254, %v410
        %412 = vmatprep.mubr.f32.mxu0 0.0
        %413 = vmatmul.mubr.f32.gmra.mrb[0].mxu0 %v302
        %v414 = vpop.f32.mrb[0].mxu0
        %v415 = vadd.f32 %v259, %v414
        %v416 = vpop.f32.mrb[0].mxu0
        %v417 = vadd.f32 %v259, %v416
        %418 = vmatprep.mubr.f32.mxu0 0.0
        %419 = vmatmul.mubr.f32.gmra.mrb[0].mxu0 %v305
        %v420 = vpop.f32.mrb[0].mxu0
        %v421 = vadd.f32 %v264, %v420
        %v422 = vpop.f32.mrb[0].mxu0
        %v423 = vadd.f32 %v264, %v422
        %424 = vmatprep.mubr.f32.mxu0 0.0
        %425 = vmatmul.mubr.f32.gmra.mrb[0].mxu0 %v308
        %v426 = vpop.f32.mrb[0].mxu0
        %v427 = vadd.f32 %v269, %v426
        %v428 = vpop.f32.mrb[0].mxu0
        %v429 = vadd.f32 %v269, %v428
        %430 = vmatprep.mubr.f32.mxu0 0.0
        %431 = vmatmul.mubr.f32.gmra.mrb[0].mxu0 %v311
        %v432 = vpop.f32.mrb[0].mxu0
        %v433 = vadd.f32 %v274, %v432
        %v434 = vpop.f32.mrb[0].mxu0
        %v435 = vadd.f32 %v274, %v434
        %436 = vmatprep.mubr.f32.mxu0 0.0
        %437 = vmatmul.mubr.f32.gmra.mrb[0].mxu0 %v314
        %v438 = vpop.f32.mrb[0].mxu0
        %v439 = vadd.f32 %v279, %v438
        %v440 = vpop.f32.mrb[0].mxu0
        %v441 = vadd.f32 %v279, %v440
        %442 = vmatprep.mubr.f32.mxu0 0.0
        %443 = vmatmul.mubr.f32.gmra.mrb[0].mxu0 %v317
        %v444 = vpop.f32.mrb[0].mxu0
        %v445 = vadd.f32 %v284, %v444
        %v446 = vpop.f32.mrb[0].mxu0
        %v447 = vadd.f32 %v284, %v446
        %448 = vdwg.mxu0
        %449 = vmatprep.subr.mxu0 %v326
        %450 = vmatpush1.msra.mxu0 %v324
        %451 = vmatprep.subr.mxu0 0.0
        %452 = vmatpush1.msra.mxu0 0.0
        %453 = vmatprep.subr.mxu0 0.0
        %454 = vmatpush1.msra.mxu0 0.0
        %455 = vmatprep.subr.mxu0 0.0
        %456 = vmatpush1.msra.mxu0 0.0
        %457 = vmatprep.subr.mxu0 0.0
        %458 = vmatpush1.msra.mxu0 0.0
        %459 = vmatprep.subr.mxu0 0.0
        %460 = vmatpush1.msra.mxu0 0.0
        %461 = vmatprep.subr.mxu0 0.0
        %462 = vmatpush1.msra.mxu0 0.0
        %463 = vmatprep.subr.mxu0 0.0
        %464 = vmatpush1.msra.mxu0 0.0
        %465 = vmatprep.subr.mxu0 0.0
        %466 = vmatpush1.msra.mxu0 0.0
        %467 = vmatprep.subr.mxu0 0.0
        %468 = vmatpush1.msra.mxu0 0.0
        %469 = vmatprep.subr.mxu0 0.0
        %470 = vmatpush1.msra.mxu0 0.0
        %471 = vmatprep.subr.mxu0 0.0
        %472 = vmatpush1.msra.mxu0 0.0
        %473 = vmatprep.subr.mxu0 0.0
        %474 = vmatpush1.msra.mxu0 0.0
        %475 = vmatprep.subr.mxu0 0.0
        %476 = vmatpush1.msra.mxu0 0.0
        %477 = vmatprep.subr.mxu0 0.0
        %478 = vmatpush1.msra.mxu0 0.0
        %479 = vmatprep.subr.mxu0 0.0
        %480 = vmatpush1.msra.mxu0 0.0
        %481 = vmatprep.subr.mxu0 0.0
        %482 = vmatpush1.msra.mxu0 0.0
        %483 = vmatprep.subr.mxu0 0.0
        %484 = vmatpush1.msra.mxu0 0.0
        %485 = vmatprep.subr.mxu0 0.0
        %486 = vmatpush1.msra.mxu0 0.0
        %487 = vmatprep.subr.mxu0 0.0
        %488 = vmatpush1.msra.mxu0 0.0
        %489 = vmatprep.subr.mxu0 0.0
        %490 = vmatpush1.msra.mxu0 0.0
        %491 = vmatprep.subr.mxu0 0.0
        %492 = vmatpush1.msra.mxu0 0.0
        %493 = vmatprep.subr.mxu0 0.0
        %494 = vmatpush1.msra.mxu0 0.0
        %495 = vmatprep.subr.mxu0 0.0
        %496 = vmatpush1.msra.mxu0 0.0
        %497 = vmatprep.subr.mxu0 0.0
        %498 = vmatpush1.msra.mxu0 0.0
        %499 = vmatprep.subr.mxu0 0.0
        %500 = vmatpush1.msra.mxu0 0.0
        %501 = vmatprep.subr.mxu0 0.0
        %502 = vmatpush1.msra.mxu0 0.0
        %503 = vmatprep.subr.mxu0 0.0
        %504 = vmatpush1.msra.mxu0 0.0
        %505 = vmatprep.subr.mxu0 0.0
        %506 = vmatpush1.msra.mxu0 0.0
        %507 = vmatprep.subr.mxu0 0.0
        %508 = vmatpush1.msra.mxu0 0.0
        %509 = vmatprep.subr.mxu0 0.0
        %510 = vmatpush1.msra.mxu0 0.0
        %511 = vmatprep.subr.mxu0 0.0
        %512 = vmatpush1.msra.mxu0 0.0
        %513 = vmatprep.mubr.f32.mxu0 0.0
        %514 = vmatmul.mubr.f32.gmra.mrb[0].mxu0 %v296
        %v515 = vpop.f32.mrb[0].mxu0
        %v516 = vadd.f32 %v249, %v515
        %v517 = vpop.f32.mrb[0].mxu0
        %v518 = vadd.f32 %v249, %v517
        %519 = vmatprep.mubr.f32.mxu0 0.0
        %520 = vmatmul.mubr.f32.gmra.mrb[0].mxu0 %v299
        %v521 = vpop.f32.mrb[0].mxu0
        %v522 = vadd.f32 %v254, %v521
        %v523 = vpop.f32.mrb[0].mxu0
        %v524 = vadd.f32 %v254, %v523
        %525 = vmatprep.mubr.f32.mxu0 0.0
        %526 = vmatmul.mubr.f32.gmra.mrb[0].mxu0 %v302
        %v527 = vpop.f32.mrb[0].mxu0
        %v528 = vadd.f32 %v259, %v527
        %v529 = vpop.f32.mrb[0].mxu0
        %v530 = vadd.f32 %v259, %v529
        %531 = vmatprep.mubr.f32.mxu0 0.0
        %532 = vmatmul.mubr.f32.gmra.mrb[0].mxu0 %v305
        %v533 = vpop.f32.mrb[0].mxu0
        %v534 = vadd.f32 %v264, %v533
        %v535 = vpop.f32.mrb[0].mxu0
        %v536 = vadd.f32 %v264, %v535
        %537 = vmatprep.mubr.f32.mxu0 0.0
        %538 = vmatmul.mubr.f32.gmra.mrb[0].mxu0 %v308
        %v539 = vpop.f32.mrb[0].mxu0
        %v540 = vadd.f32 %v269, %v539
        %v541 = vpop.f32.mrb[0].mxu0
        %v542 = vadd.f32 %v269, %v541
        %543 = vmatprep.mubr.f32.mxu0 0.0
        %544 = vmatmul.mubr.f32.gmra.mrb[0].mxu0 %v311
        %v545 = vpop.f32.mrb[0].mxu0
        %v546 = vadd.f32 %v274, %v545
        %v547 = vpop.f32.mrb[0].mxu0
        %v548 = vadd.f32 %v274, %v547
        %549 = vmatprep.mubr.f32.mxu0 0.0
        %550 = vmatmul.mubr.f32.gmra.mrb[0].mxu0 %v314
        %v551 = vpop.f32.mrb[0].mxu0
        %v552 = vadd.f32 %v279, %v551
        %v553 = vpop.f32.mrb[0].mxu0
        %v554 = vadd.f32 %v279, %v553
        %555 = vmatprep.mubr.f32.mxu0 0.0
        %556 = vmatmul.mubr.f32.gmra.mrb[0].mxu0 %v317
        %v557 = vpop.f32.mrb[0].mxu0
        %v558 = vadd.f32 %v284, %v557
        %v559 = vpop.f32.mrb[0].mxu0
        %v560 = vadd.f32 %v284, %v559
        %561 = vdwg.mxu0
        %562 = vmatprep.subr.mxu0 %v330
        %563 = vmatpush1.msra.mxu0 %v328
        %564 = vmatprep.subr.mxu0 0.0
        %565 = vmatpush1.msra.mxu0 0.0
        %566 = vmatprep.subr.mxu0 0.0
        %567 = vmatpush1.msra.mxu0 0.0
        %568 = vmatprep.subr.mxu0 0.0
        %569 = vmatpush1.msra.mxu0 0.0
        %570 = vmatprep.subr.mxu0 0.0
        %571 = vmatpush1.msra.mxu0 0.0
        %572 = vmatprep.subr.mxu0 0.0
        %573 = vmatpush1.msra.mxu0 0.0
        %574 = vmatprep.subr.mxu0 0.0
        %575 = vmatpush1.msra.mxu0 0.0
        %576 = vmatprep.subr.mxu0 0.0
        %577 = vmatpush1.msra.mxu0 0.0
        %578 = vmatprep.subr.mxu0 0.0
        %579 = vmatpush1.msra.mxu0 0.0
        %580 = vmatprep.subr.mxu0 0.0
        %581 = vmatpush1.msra.mxu0 0.0
        %582 = vmatprep.subr.mxu0 0.0
        %583 = vmatpush1.msra.mxu0 0.0
        %584 = vmatprep.subr.mxu0 0.0
        %585 = vmatpush1.msra.mxu0 0.0
        %586 = vmatprep.subr.mxu0 0.0
        %587 = vmatpush1.msra.mxu0 0.0
        %588 = vmatprep.subr.mxu0 0.0
        %589 = vmatpush1.msra.mxu0 0.0
        %590 = vmatprep.subr.mxu0 0.0
        %591 = vmatpush1.msra.mxu0 0.0
        %592 = vmatprep.subr.mxu0 0.0
        %593 = vmatpush1.msra.mxu0 0.0
        %594 = vmatprep.subr.mxu0 0.0
        %595 = vmatpush1.msra.mxu0 0.0
        %596 = vmatprep.subr.mxu0 0.0
        %597 = vmatpush1.msra.mxu0 0.0
        %598 = vmatprep.subr.mxu0 0.0
        %599 = vmatpush1.msra.mxu0 0.0
        %600 = vmatprep.subr.mxu0 0.0
        %601 = vmatpush1.msra.mxu0 0.0
        %602 = vmatprep.subr.mxu0 0.0
        %603 = vmatpush1.msra.mxu0 0.0
        %604 = vmatprep.subr.mxu0 0.0
        %605 = vmatpush1.msra.mxu0 0.0
        %606 = vmatprep.subr.mxu0 0.0
        %607 = vmatpush1.msra.mxu0 0.0
        %608 = vmatprep.subr.mxu0 0.0
        %609 = vmatpush1.msra.mxu0 0.0
        %610 = vmatprep.subr.mxu0 0.0
        %611 = vmatpush1.msra.mxu0 0.0
        %612 = vmatprep.subr.mxu0 0.0
        %613 = vmatpush1.msra.mxu0 0.0
        %614 = vmatprep.subr.mxu0 0.0
        %615 = vmatpush1.msra.mxu0 0.0
        %616 = vmatprep.subr.mxu0 0.0
        %617 = vmatpush1.msra.mxu0 0.0
        %618 = vmatprep.subr.mxu0 0.0
        %619 = vmatpush1.msra.mxu0 0.0
        %620 = vmatprep.subr.mxu0 0.0
        %621 = vmatpush1.msra.mxu0 0.0
        %622 = vmatprep.subr.mxu0 0.0
        %623 = vmatpush1.msra.mxu0 0.0
        %624 = vmatprep.subr.mxu0 0.0
        %625 = vmatpush1.msra.mxu0 0.0
        %626 = vmatprep.mubr.f32.mxu0 0.0
        %627 = vmatmul.mubr.f32.gmra.mrb[0].mxu0 %v296
        %v628 = vpop.f32.mrb[0].mxu0
        %v629 = vadd.f32 %v249, %v628
        %v630 = vpop.f32.mrb[0].mxu0
        %v631 = vadd.f32 %v249, %v630
        %632 = vmatprep.mubr.f32.mxu0 0.0
        %633 = vmatmul.mubr.f32.gmra.mrb[0].mxu0 %v299
        %v634 = vpop.f32.mrb[0].mxu0
        %v635 = vadd.f32 %v254, %v634
        %v636 = vpop.f32.mrb[0].mxu0
        %v637 = vadd.f32 %v254, %v636
        %638 = vmatprep.mubr.f32.mxu0 0.0
        %639 = vmatmul.mubr.f32.gmra.mrb[0].mxu0 %v302
        %v640 = vpop.f32.mrb[0].mxu0
        %v641 = vadd.f32 %v259, %v640
        %v642 = vpop.f32.mrb[0].mxu0
        %v643 = vadd.f32 %v259, %v642
        %644 = vmatprep.mubr.f32.mxu0 0.0
        %645 = vmatmul.mubr.f32.gmra.mrb[0].mxu0 %v305
        %v646 = vpop.f32.mrb[0].mxu0
        %v647 = vadd.f32 %v264, %v646
        %v648 = vpop.f32.mrb[0].mxu0
        %v649 = vadd.f32 %v264, %v648
        %650 = vmatprep.mubr.f32.mxu0 0.0
        %651 = vmatmul.mubr.f32.gmra.mrb[0].mxu0 %v308
        %v652 = vpop.f32.mrb[0].mxu0
        %v653 = vadd.f32 %v269, %v652
        %v654 = vpop.f32.mrb[0].mxu0
        %v655 = vadd.f32 %v269, %v654
        %656 = vmatprep.mubr.f32.mxu0 0.0
        %657 = vmatmul.mubr.f32.gmra.mrb[0].mxu0 %v311
        %v658 = vpop.f32.mrb[0].mxu0
        %v659 = vadd.f32 %v274, %v658
        %v660 = vpop.f32.mrb[0].mxu0
        %v661 = vadd.f32 %v274, %v660
        %662 = vmatprep.mubr.f32.mxu0 0.0
        %663 = vmatmul.mubr.f32.gmra.mrb[0].mxu0 %v314
        %v664 = vpop.f32.mrb[0].mxu0
        %v665 = vadd.f32 %v279, %v664
        %v666 = vpop.f32.mrb[0].mxu0
        %v667 = vadd.f32 %v279, %v666
        %668 = vmatprep.mubr.f32.mxu0 0.0
        %669 = vmatmul.mubr.f32.gmra.mrb[0].mxu0 %v317
        %v670 = vpop.f32.mrb[0].mxu0
        %v671 = vadd.f32 %v284, %v670
        %v672 = vpop.f32.mrb[0].mxu0
        %v673 = vadd.f32 %v284, %v672
        %674 = vdwg.mxu0
        %675 = vmatprep.subr.mxu0 %v334
        %676 = vmatpush1.msra.mxu0 %v332
        %677 = vmatprep.subr.mxu0 0.0
        %678 = vmatpush1.msra.mxu0 0.0
        %679 = vmatprep.subr.mxu0 0.0
        %680 = vmatpush1.msra.mxu0 0.0
        %681 = vmatprep.subr.mxu0 0.0
        %682 = vmatpush1.msra.mxu0 0.0
        %683 = vmatprep.subr.mxu0 0.0
        %684 = vmatpush1.msra.mxu0 0.0
        %685 = vmatprep.subr.mxu0 0.0
        %686 = vmatpush1.msra.mxu0 0.0
        %687 = vmatprep.subr.mxu0 0.0
        %688 = vmatpush1.msra.mxu0 0.0
        %689 = vmatprep.subr.mxu0 0.0
        %690 = vmatpush1.msra.mxu0 0.0
        %691 = vmatprep.subr.mxu0 0.0
        %692 = vmatpush1.msra.mxu0 0.0
        %693 = vmatprep.subr.mxu0 0.0
        %694 = vmatpush1.msra.mxu0 0.0
        %695 = vmatprep.subr.mxu0 0.0
        %696 = vmatpush1.msra.mxu0 0.0
        %697 = vmatprep.subr.mxu0 0.0
        %698 = vmatpush1.msra.mxu0 0.0
        %699 = vmatprep.subr.mxu0 0.0
        %700 = vmatpush1.msra.mxu0 0.0
        %701 = vmatprep.subr.mxu0 0.0
        %702 = vmatpush1.msra.mxu0 0.0
        %703 = vmatprep.subr.mxu0 0.0
        %704 = vmatpush1.msra.mxu0 0.0
        %705 = vmatprep.subr.mxu0 0.0
        %706 = vmatpush1.msra.mxu0 0.0
        %707 = vmatprep.subr.mxu0 0.0
        %708 = vmatpush1.msra.mxu0 0.0
        %709 = vmatprep.subr.mxu0 0.0
        %710 = vmatpush1.msra.mxu0 0.0
        %711 = vmatprep.subr.mxu0 0.0
        %712 = vmatpush1.msra.mxu0 0.0
        %713 = vmatprep.subr.mxu0 0.0
        %714 = vmatpush1.msra.mxu0 0.0
        %715 = vmatprep.subr.mxu0 0.0
        %716 = vmatpush1.msra.mxu0 0.0
        %717 = vmatprep.subr.mxu0 0.0
        %718 = vmatpush1.msra.mxu0 0.0
        %719 = vmatprep.subr.mxu0 0.0
        %720 = vmatpush1.msra.mxu0 0.0
        %721 = vmatprep.subr.mxu0 0.0
        %722 = vmatpush1.msra.mxu0 0.0
        %723 = vmatprep.subr.mxu0 0.0
        %724 = vmatpush1.msra.mxu0 0.0
        %725 = vmatprep.subr.mxu0 0.0
        %726 = vmatpush1.msra.mxu0 0.0
        %727 = vmatprep.subr.mxu0 0.0
        %728 = vmatpush1.msra.mxu0 0.0
        %729 = vmatprep.subr.mxu0 0.0
        %730 = vmatpush1.msra.mxu0 0.0
        %731 = vmatprep.subr.mxu0 0.0
        %732 = vmatpush1.msra.mxu0 0.0
        %733 = vmatprep.subr.mxu0 0.0
        %734 = vmatpush1.msra.mxu0 0.0
        %735 = vmatprep.subr.mxu0 0.0
        %736 = vmatpush1.msra.mxu0 0.0
        %737 = vmatprep.subr.mxu0 0.0
        %738 = vmatpush1.msra.mxu0 0.0
        %739 = vmatprep.mubr.f32.mxu0 0.0
        %740 = vmatmul.mubr.f32.gmra.mrb[0].mxu0 %v296
        %v741 = vpop.f32.mrb[0].mxu0
        %v742 = vadd.f32 %v249, %v741
        %v743 = vpop.f32.mrb[0].mxu0
        %v744 = vadd.f32 %v249, %v743
        %745 = vmatprep.mubr.f32.mxu0 0.0
        %746 = vmatmul.mubr.f32.gmra.mrb[0].mxu0 %v299
        %v747 = vpop.f32.mrb[0].mxu0
        %v748 = vadd.f32 %v254, %v747
        %v749 = vpop.f32.mrb[0].mxu0
        %v750 = vadd.f32 %v254, %v749
        %751 = vmatprep.mubr.f32.mxu0 0.0
        %752 = vmatmul.mubr.f32.gmra.mrb[0].mxu0 %v302
        %v753 = vpop.f32.mrb[0].mxu0
        %v754 = vadd.f32 %v259, %v753
        %v755 = vpop.f32.mrb[0].mxu0
        %v756 = vadd.f32 %v259, %v755
        %757 = vmatprep.mubr.f32.mxu0 0.0
        %758 = vmatmul.mubr.f32.gmra.mrb[0].mxu0 %v305
        %v759 = vpop.f32.mrb[0].mxu0
        %v760 = vadd.f32 %v264, %v759
        %v761 = vpop.f32.mrb[0].mxu0
        %v762 = vadd.f32 %v264, %v761
        %763 = vmatprep.mubr.f32.mxu0 0.0
        %764 = vmatmul.mubr.f32.gmra.mrb[0].mxu0 %v308
        %v765 = vpop.f32.mrb[0].mxu0
        %v766 = vadd.f32 %v269, %v765
        %v767 = vpop.f32.mrb[0].mxu0
        %v768 = vadd.f32 %v269, %v767
        %769 = vmatprep.mubr.f32.mxu0 0.0
        %770 = vmatmul.mubr.f32.gmra.mrb[0].mxu0 %v311
        %v771 = vpop.f32.mrb[0].mxu0
        %v772 = vadd.f32 %v274, %v771
        %v773 = vpop.f32.mrb[0].mxu0
        %v774 = vadd.f32 %v274, %v773
        %775 = vmatprep.mubr.f32.mxu0 0.0
        %776 = vmatmul.mubr.f32.gmra.mrb[0].mxu0 %v314
        %v777 = vpop.f32.mrb[0].mxu0
        %v778 = vadd.f32 %v279, %v777
        %v779 = vpop.f32.mrb[0].mxu0
        %v780 = vadd.f32 %v279, %v779
        %781 = vmatprep.mubr.f32.mxu0 0.0
        %782 = vmatmul.mubr.f32.gmra.mrb[0].mxu0 %v317
        %v783 = vpop.f32.mrb[0].mxu0
        %v784 = vadd.f32 %v284, %v783
        %v785 = vpop.f32.mrb[0].mxu0
        %v786 = vadd.f32 %v284, %v785
        %787 = vdwg.mxu0
        %v788 = vmax.f32 %v403, 0.0
        %v789 = vmax.f32 %v405, 0.0
        %v790 = vmax.f32 %v516, 0.0
        %v791 = vmax.f32 %v518, 0.0
        %v792 = vmax.f32 %v629, 0.0
        %v793 = vmax.f32 %v631, 0.0
        %v794 = vmax.f32 %v742, 0.0
        %v795 = vmax.f32 %v744, 0.0
        %v796 = vmax.f32 %v409, 0.0
        %v797 = vmax.f32 %v411, 0.0
        %v798 = vmax.f32 %v522, 0.0
        %v799 = vmax.f32 %v524, 0.0
        %v800 = vmax.f32 %v635, 0.0
        %v801 = vmax.f32 %v637, 0.0
        %v802 = vmax.f32 %v748, 0.0
        %v803 = vmax.f32 %v750, 0.0
        %v804 = vmax.f32 %v415, 0.0
        %v805 = vmax.f32 %v417, 0.0
        %v806 = vmax.f32 %v528, 0.0
        %v807 = vmax.f32 %v530, 0.0
        %v808 = vmax.f32 %v641, 0.0
        %v809 = vmax.f32 %v643, 0.0
        %v810 = vmax.f32 %v754, 0.0
        %v811 = vmax.f32 %v756, 0.0
        %v812 = vmax.f32 %v421, 0.0
        %v813 = vmax.f32 %v423, 0.0
        %v814 = vmax.f32 %v534, 0.0
        %v815 = vmax.f32 %v536, 0.0
        %v816 = vmax.f32 %v647, 0.0
        %v817 = vmax.f32 %v649, 0.0
        %v818 = vmax.f32 %v760, 0.0
        %v819 = vmax.f32 %v762, 0.0
        %v820 = vmax.f32 %v427, 0.0
        %v821 = vmax.f32 %v429, 0.0
        %v822 = vmax.f32 %v540, 0.0
        %v823 = vmax.f32 %v542, 0.0
        %v824 = vmax.f32 %v653, 0.0
        %v825 = vmax.f32 %v655, 0.0
        %v826 = vmax.f32 %v766, 0.0
        %v827 = vmax.f32 %v768, 0.0
        %v828 = vmax.f32 %v433, 0.0
        %v829 = vmax.f32 %v435, 0.0
        %v830 = vmax.f32 %v546, 0.0
        %v831 = vmax.f32 %v548, 0.0
        %v832 = vmax.f32 %v659, 0.0
        %v833 = vmax.f32 %v661, 0.0
        %v834 = vmax.f32 %v772, 0.0
        %v835 = vmax.f32 %v774, 0.0
        %v836 = vmax.f32 %v439, 0.0
        %v837 = vmax.f32 %v441, 0.0
        %v838 = vmax.f32 %v552, 0.0
        %v839 = vmax.f32 %v554, 0.0
        %v840 = vmax.f32 %v665, 0.0
        %v841 = vmax.f32 %v667, 0.0
        %v842 = vmax.f32 %v778, 0.0
        %v843 = vmax.f32 %v780, 0.0
        %v844 = vmax.f32 %v445, 0.0
        %v845 = vmax.f32 %v447, 0.0
        %v846 = vmax.f32 %v558, 0.0
        %v847 = vmax.f32 %v560, 0.0
        %v848 = vmax.f32 %v671, 0.0
        %v849 = vmax.f32 %v673, 0.0
        %v850 = vmax.f32 %v784, 0.0
        %v851 = vmax.f32 %v786, 0.0
        %v852 = vld [vmem:[%s3] sm:$0x3]
        %v853 = vld [vmem:[%s4] sm:$0x3]
        %855 = vset.pattern.permute.xlu0 0
        %856 = vperm.xlu0 %855, %v853
        %v857 = vpop.permute.xlu0 %856
        %vm859 = vcmask 523264
        %v861 = vsel %vm859, %v852, 0
        %863 = vmatprep.subr.mxu0 %v789
        %864 = vmatpush1.msra.mxu0 %v788
        %865 = vmatprep.subr.mxu0 %v797
        %866 = vmatpush1.msra.mxu0 %v796
        %867 = vmatprep.subr.mxu0 %v805
        %868 = vmatpush1.msra.mxu0 %v804
        %869 = vmatprep.subr.mxu0 %v813
        %870 = vmatpush1.msra.mxu0 %v812
        %871 = vmatprep.subr.mxu0 %v821
        %872 = vmatpush1.msra.mxu0 %v820
        %873 = vmatprep.subr.mxu0 %v829
        %874 = vmatpush1.msra.mxu0 %v828
        %875 = vmatprep.subr.mxu0 %v837
        %876 = vmatpush1.msra.mxu0 %v836
        %877 = vmatprep.subr.mxu0 %v845
        %878 = vmatpush1.msra.mxu0 %v844
        %879 = vmatprep.subr.mxu0 0.0
        %880 = vmatpush1.msra.mxu0 0.0
        %881 = vmatprep.subr.mxu0 0.0
        %882 = vmatpush1.msra.mxu0 0.0
        %883 = vmatprep.subr.mxu0 0.0
        %884 = vmatpush1.msra.mxu0 0.0
        %885 = vmatprep.subr.mxu0 0.0
        %886 = vmatpush1.msra.mxu0 0.0
        %887 = vmatprep.subr.mxu0 0.0
        %888 = vmatpush1.msra.mxu0 0.0
        %889 = vmatprep.subr.mxu0 0.0
        %890 = vmatpush1.msra.mxu0 0.0
        %891 = vmatprep.subr.mxu0 0.0
        %892 = vmatpush1.msra.mxu0 0.0
        %893 = vmatprep.subr.mxu0 0.0
        %894 = vmatpush1.msra.mxu0 0.0
        %895 = vmatprep.subr.mxu0 0.0
        %896 = vmatpush1.msra.mxu0 0.0
        %897 = vmatprep.subr.mxu0 0.0
        %898 = vmatpush1.msra.mxu0 0.0
        %899 = vmatprep.subr.mxu0 0.0
        %900 = vmatpush1.msra.mxu0 0.0
        %901 = vmatprep.subr.mxu0 0.0
        %902 = vmatpush1.msra.mxu0 0.0
        %903 = vmatprep.subr.mxu0 0.0
        %904 = vmatpush1.msra.mxu0 0.0
        %905 = vmatprep.subr.mxu0 0.0
        %906 = vmatpush1.msra.mxu0 0.0
        %907 = vmatprep.subr.mxu0 0.0
        %908 = vmatpush1.msra.mxu0 0.0
        %909 = vmatprep.subr.mxu0 0.0
        %910 = vmatpush1.msra.mxu0 0.0
        %911 = vmatprep.subr.mxu0 0.0
        %912 = vmatpush1.msra.mxu0 0.0
        %913 = vmatprep.subr.mxu0 0.0
        %914 = vmatpush1.msra.mxu0 0.0
        %915 = vmatprep.subr.mxu0 0.0
        %916 = vmatpush1.msra.mxu0 0.0
        %917 = vmatprep.subr.mxu0 0.0
        %918 = vmatpush1.msra.mxu0 0.0
        %919 = vmatprep.subr.mxu0 0.0
        %920 = vmatpush1.msra.mxu0 0.0
        %921 = vmatprep.subr.mxu0 0.0
        %922 = vmatpush1.msra.mxu0 0.0
        %923 = vmatprep.subr.mxu0 0.0
        %924 = vmatpush1.msra.mxu0 0.0
        %925 = vmatprep.subr.mxu0 0.0
        %926 = vmatpush1.msra.mxu0 0.0
        %927 = vmatprep.mubr.f32.mxu0 0.0
        %928 = vmatmul.mubr.f32.gmra.mrb[0].mxu0 %v861
        %v929 = vpop.f32.mrb[0].mxu0
        %v930 = vadd.f32 %v857, %v929
        %v931 = vpop.f32.mrb[0].mxu0
        %v932 = vadd.f32 %v857, %v931
        %933 = vdwg.mxu0
        %934 = vmatprep.subr.mxu0 %v791
        %935 = vmatpush1.msra.mxu0 %v790
        %936 = vmatprep.subr.mxu0 %v799
        %937 = vmatpush1.msra.mxu0 %v798
        %938 = vmatprep.subr.mxu0 %v807
        %939 = vmatpush1.msra.mxu0 %v806
        %940 = vmatprep.subr.mxu0 %v815
        %941 = vmatpush1.msra.mxu0 %v814
        %942 = vmatprep.subr.mxu0 %v823
        %943 = vmatpush1.msra.mxu0 %v822
        %944 = vmatprep.subr.mxu0 %v831
        %945 = vmatpush1.msra.mxu0 %v830
        %946 = vmatprep.subr.mxu0 %v839
        %947 = vmatpush1.msra.mxu0 %v838
        %948 = vmatprep.subr.mxu0 %v847
        %949 = vmatpush1.msra.mxu0 %v846
        %950 = vmatprep.subr.mxu0 0.0
        %951 = vmatpush1.msra.mxu0 0.0
        %952 = vmatprep.subr.mxu0 0.0
        %953 = vmatpush1.msra.mxu0 0.0
        %954 = vmatprep.subr.mxu0 0.0
        %955 = vmatpush1.msra.mxu0 0.0
        %956 = vmatprep.subr.mxu0 0.0
        %957 = vmatpush1.msra.mxu0 0.0
        %958 = vmatprep.subr.mxu0 0.0
        %959 = vmatpush1.msra.mxu0 0.0
        %960 = vmatprep.subr.mxu0 0.0
        %961 = vmatpush1.msra.mxu0 0.0
        %962 = vmatprep.subr.mxu0 0.0
        %963 = vmatpush1.msra.mxu0 0.0
        %964 = vmatprep.subr.mxu0 0.0
        %965 = vmatpush1.msra.mxu0 0.0
        %966 = vmatprep.subr.mxu0 0.0
        %967 = vmatpush1.msra.mxu0 0.0
        %968 = vmatprep.subr.mxu0 0.0
        %969 = vmatpush1.msra.mxu0 0.0
        %970 = vmatprep.subr.mxu0 0.0
        %971 = vmatpush1.msra.mxu0 0.0
        %972 = vmatprep.subr.mxu0 0.0
        %973 = vmatpush1.msra.mxu0 0.0
        %974 = vmatprep.subr.mxu0 0.0
        %975 = vmatpush1.msra.mxu0 0.0
        %976 = vmatprep.subr.mxu0 0.0
        %977 = vmatpush1.msra.mxu0 0.0
        %978 = vmatprep.subr.mxu0 0.0
        %979 = vmatpush1.msra.mxu0 0.0
        %980 = vmatprep.subr.mxu0 0.0
        %981 = vmatpush1.msra.mxu0 0.0
        %982 = vmatprep.subr.mxu0 0.0
        %983 = vmatpush1.msra.mxu0 0.0
        %984 = vmatprep.subr.mxu0 0.0
        %985 = vmatpush1.msra.mxu0 0.0
        %986 = vmatprep.subr.mxu0 0.0
        %987 = vmatpush1.msra.mxu0 0.0
        %988 = vmatprep.subr.mxu0 0.0
        %989 = vmatpush1.msra.mxu0 0.0
        %990 = vmatprep.subr.mxu0 0.0
        %991 = vmatpush1.msra.mxu0 0.0
        %992 = vmatprep.subr.mxu0 0.0
        %993 = vmatpush1.msra.mxu0 0.0
        %994 = vmatprep.subr.mxu0 0.0
        %995 = vmatpush1.msra.mxu0 0.0
        %996 = vmatprep.subr.mxu0 0.0
        %997 = vmatpush1.msra.mxu0 0.0
        %998 = vmatprep.mubr.f32.mxu0 0.0
        %999 = vmatmul.mubr.f32.gmra.mrb[0].mxu0 %v861
        %v1000 = vpop.f32.mrb[0].mxu0
        %v1001 = vadd.f32 %v857, %v1000
        %v1002 = vpop.f32.mrb[0].mxu0
        %v1003 = vadd.f32 %v857, %v1002
        %1004 = vdwg.mxu0
        %1005 = vmatprep.subr.mxu0 %v793
        %1006 = vmatpush1.msra.mxu0 %v792
        %1007 = vmatprep.subr.mxu0 %v801
        %1008 = vmatpush1.msra.mxu0 %v800
        %1009 = vmatprep.subr.mxu0 %v809
        %1010 = vmatpush1.msra.mxu0 %v808
        %1011 = vmatprep.subr.mxu0 %v817
        %1012 = vmatpush1.msra.mxu0 %v816
        %1013 = vmatprep.subr.mxu0 %v825
        %1014 = vmatpush1.msra.mxu0 %v824
        %1015 = vmatprep.subr.mxu0 %v833
        %1016 = vmatpush1.msra.mxu0 %v832
        %1017 = vmatprep.subr.mxu0 %v841
        %1018 = vmatpush1.msra.mxu0 %v840
        %1019 = vmatprep.subr.mxu0 %v849
        %1020 = vmatpush1.msra.mxu0 %v848
        %1021 = vmatprep.subr.mxu0 0.0
        %1022 = vmatpush1.msra.mxu0 0.0
        %1023 = vmatprep.subr.mxu0 0.0
        %1024 = vmatpush1.msra.mxu0 0.0
        %1025 = vmatprep.subr.mxu0 0.0
        %1026 = vmatpush1.msra.mxu0 0.0
        %1027 = vmatprep.subr.mxu0 0.0
        %1028 = vmatpush1.msra.mxu0 0.0
        %1029 = vmatprep.subr.mxu0 0.0
        %1030 = vmatpush1.msra.mxu0 0.0
        %1031 = vmatprep.subr.mxu0 0.0
        %1032 = vmatpush1.msra.mxu0 0.0
        %1033 = vmatprep.subr.mxu0 0.0
        %1034 = vmatpush1.msra.mxu0 0.0
        %1035 = vmatprep.subr.mxu0 0.0
        %1036 = vmatpush1.msra.mxu0 0.0
        %1037 = vmatprep.subr.mxu0 0.0
        %1038 = vmatpush1.msra.mxu0 0.0
        %1039 = vmatprep.subr.mxu0 0.0
        %1040 = vmatpush1.msra.mxu0 0.0
        %1041 = vmatprep.subr.mxu0 0.0
        %1042 = vmatpush1.msra.mxu0 0.0
        %1043 = vmatprep.subr.mxu0 0.0
        %1044 = vmatpush1.msra.mxu0 0.0
        %1045 = vmatprep.subr.mxu0 0.0
        %1046 = vmatpush1.msra.mxu0 0.0
        %1047 = vmatprep.subr.mxu0 0.0
        %1048 = vmatpush1.msra.mxu0 0.0
        %1049 = vmatprep.subr.mxu0 0.0
        %1050 = vmatpush1.msra.mxu0 0.0
        %1051 = vmatprep.subr.mxu0 0.0
        %1052 = vmatpush1.msra.mxu0 0.0
        %1053 = vmatprep.subr.mxu0 0.0
        %1054 = vmatpush1.msra.mxu0 0.0
        %1055 = vmatprep.subr.mxu0 0.0
        %1056 = vmatpush1.msra.mxu0 0.0
        %1057 = vmatprep.subr.mxu0 0.0
        %1058 = vmatpush1.msra.mxu0 0.0
        %1059 = vmatprep.subr.mxu0 0.0
        %1060 = vmatpush1.msra.mxu0 0.0
        %1061 = vmatprep.subr.mxu0 0.0
        %1062 = vmatpush1.msra.mxu0 0.0
        %1063 = vmatprep.subr.mxu0 0.0
        %1064 = vmatpush1.msra.mxu0 0.0
        %1065 = vmatprep.subr.mxu0 0.0
        %1066 = vmatpush1.msra.mxu0 0.0
        %1067 = vmatprep.subr.mxu0 0.0
        %1068 = vmatpush1.msra.mxu0 0.0
        %1069 = vmatprep.mubr.f32.mxu0 0.0
        %1070 = vmatmul.mubr.f32.gmra.mrb[0].mxu0 %v861
        %v1071 = vpop.f32.mrb[0].mxu0
        %v1072 = vadd.f32 %v857, %v1071
        %v1073 = vpop.f32.mrb[0].mxu0
        %v1074 = vadd.f32 %v857, %v1073
        %1075 = vdwg.mxu0
        %1076 = vmatprep.subr.mxu0 %v795
        %1077 = vmatpush1.msra.mxu0 %v794
        %1078 = vmatprep.subr.mxu0 %v803
        %1079 = vmatpush1.msra.mxu0 %v802
        %1080 = vmatprep.subr.mxu0 %v811
        %1081 = vmatpush1.msra.mxu0 %v810
        %1082 = vmatprep.subr.mxu0 %v819
        %1083 = vmatpush1.msra.mxu0 %v818
        %1084 = vmatprep.subr.mxu0 %v827
        %1085 = vmatpush1.msra.mxu0 %v826
        %1086 = vmatprep.subr.mxu0 %v835
        %1087 = vmatpush1.msra.mxu0 %v834
        %1088 = vmatprep.subr.mxu0 %v843
        %1089 = vmatpush1.msra.mxu0 %v842
        %1090 = vmatprep.subr.mxu0 %v851
        %1091 = vmatpush1.msra.mxu0 %v850
        %1092 = vmatprep.subr.mxu0 0.0
        %1093 = vmatpush1.msra.mxu0 0.0
        %1094 = vmatprep.subr.mxu0 0.0
        %1095 = vmatpush1.msra.mxu0 0.0
        %1096 = vmatprep.subr.mxu0 0.0
        %1097 = vmatpush1.msra.mxu0 0.0
        %1098 = vmatprep.subr.mxu0 0.0
        %1099 = vmatpush1.msra.mxu0 0.0
        %1100 = vmatprep.subr.mxu0 0.0
        %1101 = vmatpush1.msra.mxu0 0.0
        %1102 = vmatprep.subr.mxu0 0.0
        %1103 = vmatpush1.msra.mxu0 0.0
        %1104 = vmatprep.subr.mxu0 0.0
        %1105 = vmatpush1.msra.mxu0 0.0
        %1106 = vmatprep.subr.mxu0 0.0
        %1107 = vmatpush1.msra.mxu0 0.0
        %1108 = vmatprep.subr.mxu0 0.0
        %1109 = vmatpush1.msra.mxu0 0.0
        %1110 = vmatprep.subr.mxu0 0.0
        %1111 = vmatpush1.msra.mxu0 0.0
        %1112 = vmatprep.subr.mxu0 0.0
        %1113 = vmatpush1.msra.mxu0 0.0
        %1114 = vmatprep.subr.mxu0 0.0
        %1115 = vmatpush1.msra.mxu0 0.0
        %1116 = vmatprep.subr.mxu0 0.0
        %1117 = vmatpush1.msra.mxu0 0.0
        %1118 = vmatprep.subr.mxu0 0.0
        %1119 = vmatpush1.msra.mxu0 0.0
        %1120 = vmatprep.subr.mxu0 0.0
        %1121 = vmatpush1.msra.mxu0 0.0
        %1122 = vmatprep.subr.mxu0 0.0
        %1123 = vmatpush1.msra.mxu0 0.0
        %1124 = vmatprep.subr.mxu0 0.0
        %1125 = vmatpush1.msra.mxu0 0.0
        %1126 = vmatprep.subr.mxu0 0.0
        %1127 = vmatpush1.msra.mxu0 0.0
        %1128 = vmatprep.subr.mxu0 0.0
        %1129 = vmatpush1.msra.mxu0 0.0
        %1130 = vmatprep.subr.mxu0 0.0
        %1131 = vmatpush1.msra.mxu0 0.0
        %1132 = vmatprep.subr.mxu0 0.0
        %1133 = vmatpush1.msra.mxu0 0.0
        %1134 = vmatprep.subr.mxu0 0.0
        %1135 = vmatpush1.msra.mxu0 0.0
        %1136 = vmatprep.subr.mxu0 0.0
        %1137 = vmatpush1.msra.mxu0 0.0
        %1138 = vmatprep.subr.mxu0 0.0
        %1139 = vmatpush1.msra.mxu0 0.0
        %1140 = vmatprep.mubr.f32.mxu0 0.0
        %1141 = vmatmul.mubr.f32.gmra.mrb[0].mxu0 %v861
        %v1142 = vpop.f32.mrb[0].mxu0
        %v1143 = vadd.f32 %v857, %v1142
        %v1144 = vpop.f32.mrb[0].mxu0
        %v1145 = vadd.f32 %v857, %v1144
        %1146 = vdwg.mxu0
        %v1155 = vcombine.low %v930, %v932
        %v1156 = vcombine.low %v1001, %v1003
        %v1158 = vunpack.c.l.s4 1983009808
        %v1159 = vunpack.c.0.s8 %v1158
        %v1160 = vlaneseq
        %v1161 = vshrl.u32 %v1160, 7
        %v1162 = vsub.s32 %v1159, %v1161
        %v1163 = vrot.slane %v1155, %v1162
        %v1165 = vunpack.c.l.s4 1983009808
        %v1166 = vunpack.c.0.s8 %v1165
        %v1167 = vlaneseq
        %v1168 = vshrl.u32 %v1167, 7
        %v1169 = vsub.s32 %v1166, %v1168
        %v1170 = vrot.slane %v1156, %v1169
        %v1171 = vcombine.low %v1163, %v1170
        %v1172 = vcombine.low %v1072, %v1074
        %v1173 = vcombine.low %v1143, %v1145
        %v1175 = vunpack.c.l.s4 1983009808
        %v1176 = vunpack.c.0.s8 %v1175
        %v1177 = vlaneseq
        %v1178 = vshrl.u32 %v1177, 7
        %v1179 = vsub.s32 %v1176, %v1178
        %v1180 = vrot.slane %v1172, %v1179
        %v1182 = vunpack.c.l.s4 1983009808
        %v1183 = vunpack.c.0.s8 %v1182
        %v1184 = vlaneseq
        %v1185 = vshrl.u32 %v1184, 7
        %v1186 = vsub.s32 %v1183, %v1185
        %v1187 = vrot.slane %v1173, %v1186
        %v1188 = vcombine.low %v1180, %v1187
        %1191 = vst [vmem:[%s218] sm:$0xff] %v1171
        %1192 = vst [vmem:[%s218 + $0x8] sm:$0xff] %v1188
        %s1193 = sand.u32 %s137, 1
        %s1194 = scalar_lea.sflag [#allocation3], %s1193
        %s1195 = sand.u32 %s137, 1
        %s1196 = smul.addr %s1195, 16
        %s1197 = scalar_lea.vmem [#allocation2], %s1196
        // Predicated region
        $region41: #{tpu_custom_call.1} parent=39 // pred_check
          %p1198 = pneg %p147
        $region42: #{tpu_custom_call.1} parent=39 // pred_check_branch
          %1200 = sbr.rel (%p1198) target = $region44
        $region43: #{tpu_custom_call.1} parent=39 // pred_region
          %s1201 = smul.u32 8, %s19
          %s1203 = ssub.s32 256, 256
          %1204 = vsyncadd %s1194, %s1203
          %s1205 = smul.addr %s1201, 32
          %s1206 = scalar_lea.hbm %s5, %s1205
          %s1208 = sshll.u32 %s1197, 4
          %s1209 = int_to_ptr.vmem [resolvable:$true] %s1208
          %1211 = dma.vmem_to_hbm [thread:$0]  %s1209, 256, %s1206, %s1194
        $region44: #{tpu_custom_call.1} parent=39 // pred_fallthru
          _
      $region40: #{tpu_custom_call.1} parent=5 // pred_fallthru
        _
      %p1212 = scmp.le.s32.totalorder 2, %s14
      // Predicated region
      $region45: #{tpu_custom_call.1} parent=5 // pred_check
        %p1213 = pneg %p1212
      $region46: #{tpu_custom_call.1} parent=5 // pred_check_branch
        %1215 = sbr.rel (%p1213) target = $region48
      $region47: #{tpu_custom_call.1} parent=5 // pred_region
        %s1216 = ssub.s32 %s14, 2
        // Predicated region
        $region49: #{tpu_custom_call.1} parent=47 // pred_check
          %p1217 = pneg %p153
        $region50: #{tpu_custom_call.1} parent=47 // pred_check_branch
          %1219 = sbr.rel (%p1217) target = $region52
        $region51: #{tpu_custom_call.1} parent=47 // pred_region
          %s1220 = sand.u32 %s138, 1
          %s1221 = scalar_lea.sflag [#allocation3], %s1220
          %s1222 = sand.u32 %s138, 1
          %s1223 = smul.addr %s1222, 16
          %s1224 = scalar_lea.vmem [#allocation2], %s1223
          %1225 = dma.done %s1221, 256
        $region52: #{tpu_custom_call.1} parent=47 // pred_fallthru
          _
      $region48: #{tpu_custom_call.1} parent=5 // pred_fallthru
        _
    $region6: #{tpu_custom_call.1} parent=1 // loop_footer
      %s18 = sadd.s32 1, %s14
    $region7: #{tpu_custom_call.1} parent=1 // loop_footer_branch
      %13 = sbr.rel target = $region3
    $region8: #{tpu_custom_call.1} parent=1 // loop_exit
      _
    %1226 = vsyncpa [#allocation3], 1
    %s1227 = scalar_lea.sflag [#allocation3], 1
    %1228 = vsyncpa %s1227, 1

</llo_original>
